<compile_context>
chip_gen: v7x
topology: tpu7x:2x2x1
jax: 0.10.0
libtpu: 0.0.40
codegen_flags: <defaults>
</compile_context>

<pallas_src>
import functools

import jax
import jax.numpy as jnp
from jax.experimental import pallas as pl
from jax.experimental.pallas import tpu as pltpu


def _round_up(a, b):
    return (a + b - 1) // b * b


def _proj_kernel(x_ref, w_ref, b_ref, o_ref):
    """[TI, Fin] @ [Fin, 2*H*C] + b -> [TI, 2*H*C]  (xl | xr for all heads)."""
    o_ref[...] = (jnp.dot(x_ref[...], w_ref[...],
                          preferred_element_type=jnp.float32) + b_ref[...])


def _attn_kernel(att_ref, xlt_ref, xl_ref, xr_ref, adj_ref, bias_ref, o_ref,
                 *, heads, channels):
    """One row tile (TI target nodes) of GATv2 attention, all heads fused."""
    H, C = heads, channels
    ti, np_ = adj_ref.shape

    xlt = xlt_ref[...]                        # [H*C, Np] source feats (transposed)
    xl = xl_ref[...]                          # [Np, H*C] source feats
    xr = xr_ref[...]                          # [TI, H*C] target feats (this tile)
    bias = bias_ref[...]                      # [1, H*C]
    # int8 adjacency row slab: adj[i, j] = 1 iff edge j -> i (plus self loops).
    mask = adj_ref[...].astype(jnp.float32) > 0.0    # [TI, Np]
    neg = jnp.float32(-1e30)

    for h in range(H):
        lo, hi = h * C, (h + 1) * C
        xr_h = xr[:, lo:hi]                   # [TI, C]
        xlt_h = xlt[lo:hi, :]                 # [C, Np]

        # e[i, j] = att . leaky_relu(xr[i] + xl[j], 0.2)
        #         = 0.2*(att.xr[i] + att.xl[j]) + sum_c 0.8*att_c*relu(...)
        # Rank-1 part -> O(N*C) scalar FMAs; relu part accumulated channel by
        # channel on lane-dense [TI, Np] tiles (no [TI, Np, C] intermediate).
        rr = jnp.zeros((ti, 1), jnp.float32)
        rl = jnp.zeros((1, np_), jnp.float32)
        acc = jnp.zeros((ti, np_), jnp.float32)
        for c in range(C):
            a_c = att_ref[lo + c]             # SMEM scalar
            xr_c = xr_h[:, c:c + 1]           # [TI, 1]
            xl_c = xlt_h[c:c + 1, :]          # [1, Np]
            rr = rr + a_c * xr_c
            rl = rl + a_c * xl_c
            acc = acc + (0.8 * a_c) * jnp.maximum(xr_c + xl_c, 0.0)
        e = 0.2 * (rr + rl) + acc             # [TI, Np]

        # Masked softmax over source nodes j.  Self loops guarantee a real
        # entry per row, so exp(-1e30 - e_max) underflows to exactly 0 and no
        # extra "* adj" pass is needed.
        e = jnp.where(mask, e, neg)
        e_max = jnp.max(e, axis=-1, keepdims=True)     # [TI, 1]
        p = jnp.exp(e - e_max)                          # [TI, Np]
        denom = jnp.sum(p, axis=-1, keepdims=True)      # [TI, 1]

        # Aggregate un-normalized on the MXU, then normalize the [TI, C]
        # result (N*C multiplies instead of N^2 divides).
        num = jnp.dot(p, xl[:, lo:hi], preferred_element_type=jnp.float32)
        inv = pl.reciprocal(denom)   # approx=True would push this to the EUP
        o_ref[:, lo:hi] = jnp.tanh(num * inv + bias[:, lo:hi]).astype(o_ref.dtype)


def gat_forward(x, edge_index, edge_weight, params, *, heads, out_channels,
                concat=True, row_tile=64):
    """GAT.forward: tanh(GATv2Conv(x, edge_index)).  edge_weight is unused
    (GATv2Conv's forward ignores it), matching the PyTorch module."""
    del edge_weight
    assert concat, "only the default concat=True configuration is implemented"
    assert out_channels % heads == 0, "incorrect number heads"
    N, Fin = x.shape
    H = heads
    C = out_channels // H
    HC = H * C

    # Row tile: multiple of 32 so the int8 adjacency row slab is tile-aligned.
    TI = max(32, _round_up(min(row_tile, N), 32))
    Np = _round_up(N, TI)
    n_tiles = Np // TI

    wl, wr, bl, br, att, bias = (params["wl"], params["wr"], params["bl"],
                                 params["br"], params["att"], params["bias"])

    # ---- glue: flatten per-head params into lane-dense [*, H*C] layouts ----
    w_all = jnp.concatenate(
        [jnp.transpose(wl, (1, 0, 2)).reshape(Fin, HC),
         jnp.transpose(wr, (1, 0, 2)).reshape(Fin, HC)], axis=1)   # [Fin, 2HC]
    b_all = jnp.concatenate([bl.reshape(1, HC), br.reshape(1, HC)], axis=1)
    att_flat = att.reshape(HC).astype(jnp.float32)                  # [HC]
    bias_flat = bias.reshape(1, HC).astype(jnp.float32)             # [1, HC]

    # ---- glue: dense int8 adjacency mask with self loops (add_self_loops) ----
    # TODO(synk): for genuinely sparse graphs, stream only nonzero column
    # blocks via scalar-prefetched block lists instead of a dense N x N mask.
    src, dst = edge_index[0], edge_index[1]
    adj = jnp.zeros((Np, Np), jnp.float32).at[dst, src].set(1.0)
    r = jnp.arange(N)
    adj = adj.at[r, r].set(1.0)
    adj_i8 = adj.astype(jnp.int8)            # 4x less HBM traffic than f32

    x_pad = jnp.pad(x.astype(jnp.float32), ((0, Np - N), (0, 0)))

    # ---- kernel 1: fused source/target linear transform (all heads) ----
    proj = pl.pallas_call(
        _proj_kernel,
        out_shape=jax.ShapeDtypeStruct((Np, 2 * HC), jnp.float32),
        grid=(n_tiles,),
        in_specs=[
            pl.BlockSpec((TI, Fin), lambda i: (i, 0)),
            pl.BlockSpec((Fin, 2 * HC), lambda i: (0, 0)),
            pl.BlockSpec((1, 2 * HC), lambda i: (0, 0)),
        ],
        out_specs=pl.BlockSpec((TI, 2 * HC), lambda i: (i, 0)),
        compiler_params=pltpu.CompilerParams(
            dimension_semantics=("parallel",)),
    )(x_pad, w_all, b_all)

    xl = proj[:, :HC]          # [Np, HC] lin_l(x): source features
    xr = proj[:, HC:]          # [Np, HC] lin_r(x): target features
    xlt = xl.T                 # [HC, Np] layout plumbing for the channel loop

    # ---- kernel 2: row-tiled attention + aggregation + bias + tanh ----
    # TODO(synk): attention dropout skipped (module default dropout=0.0 / eval).
    kernel = functools.partial(_attn_kernel, heads=H, channels=C)
    out = pl.pallas_call(
        kernel,
        out_shape=jax.ShapeDtypeStruct((Np, HC), jnp.float32),
        grid=(n_tiles,),
        in_specs=[
            pl.BlockSpec(memory_space=pltpu.MemorySpace.SMEM),   # att scalars
            pl.BlockSpec((HC, Np), lambda i: (0, 0)),            # xl^T (resident)
            pl.BlockSpec((Np, HC), lambda i: (0, 0)),            # xl   (resident)
            pl.BlockSpec((TI, HC), lambda i: (i, 0)),            # xr row tile
            pl.BlockSpec((TI, Np), lambda i: (i, 0)),            # adj row slab
            pl.BlockSpec((1, HC), lambda i: (0, 0)),             # final bias
        ],
        out_specs=pl.BlockSpec((TI, HC), lambda i: (i, 0)),
        compiler_params=pltpu.CompilerParams(
            dimension_semantics=("parallel",),
            vmem_limit_bytes=32 * 1024 * 1024),
    )(att_flat, xlt, xl, xr, adj_i8, bias_flat)

    # Output is already in the PyTorch concat layout out[n, h*C + c].
    return out[:N]


def gat_reference(x, adj, params):
    """Pure-JAX reference of the same math (for the correctness check)."""
    wl, wr, bl, br, att, bias = (params["wl"], params["wr"], params["bl"],
                                 params["br"], params["att"], params["bias"])
    hp = jax.lax.Precision.HIGHEST
    xl = jnp.einsum("nf,hfc->nhc", x, wl, precision=hp) + bl[:, 0][None]
    xr = jnp.einsum("nf,hfc->nhc", x, wr, precision=hp) + br[:, 0][None]
    s = xr[:, None, :, :] + xl[None, :, :, :]                 # [Ni, Nj, H, C]
    s = jnp.where(s > 0, s, 0.2 * s)                          # LeakyReLU(0.2)
    e = jnp.einsum("ijhc,hc->ijh", s, att[:, 0], precision=hp)
    mask = adj > 0.5
    e = jnp.where(mask[..., None], e, -1e30)
    e = e - e.max(axis=1, keepdims=True)
    p = jnp.exp(e) * adj[..., None]
    alpha = p / p.sum(axis=1, keepdims=True)
    out = jnp.einsum("ijh,jhc->ihc", alpha, xl, precision=hp)
    out = jnp.tanh(out + bias[:, 0][None])
    return out.reshape(x.shape[0], -1)


if __name__ == "__main__":
    key = jax.random.PRNGKey(0)
    N, in_channels, out_channels, heads = 128, 16, 32, 2
    C = out_channels // heads
    ks = jax.random.split(key, 8)

    x = jax.random.normal(ks[0], (N, in_channels), jnp.float32)

    # Simple deterministic graph: bidirectional ring + skip-3 edges.
    r = jnp.arange(N)
    src = jnp.concatenate([r, (r + 1) % N, r])
    dst = jnp.concatenate([(r + 1) % N, r, (r + 3) % N])
    edge_index = jnp.stack([src, dst]).astype(jnp.int32)            # [2, E]
    edge_weight = jnp.ones((edge_index.shape[1],), jnp.float32)     # unused

    def glorot(k, shape, fan_in, fan_out):
        lim = (6.0 / (fan_in + fan_out)) ** 0.5
        return jax.random.uniform(k, shape, jnp.float32, -lim, lim)

    params = {
        "wl": glorot(ks[1], (heads, in_channels, C), in_channels, heads * C),
        "wr": glorot(ks[2], (heads, in_channels, C), in_channels, heads * C),
        "att": glorot(ks[3], (heads, 1, C), C, 1),
        "bl": 0.01 * jax.random.normal(ks[4], (heads, 1, C), jnp.float32),
        "br": 0.01 * jax.random.normal(ks[5], (heads, 1, C), jnp.float32),
        "bias": 0.01 * jax.random.normal(ks[6], (heads, 1, C), jnp.float32),
    }

    out = gat_forward(x, edge_index, edge_weight, params,
                      heads=heads, out_channels=out_channels, concat=True)
    out = jax.block_until_ready(out)

    # Correctness check against the pure-JAX reference.
    adj = jnp.zeros((N, N), jnp.float32).at[edge_index[1], edge_index[0]].set(1.0)
    adj = jnp.maximum(adj, jnp.eye(N, dtype=jnp.float32))
    ref = gat_reference(x, adj, params)
    assert out.shape == (N, out_channels)
    assert bool(jnp.all(jnp.isfinite(out)))
    err = float(jnp.max(jnp.abs(out - ref)))
    assert jnp.allclose(out, ref, atol=2e-4, rtol=2e-4), err

    print("KERNEL_OK")
</pallas_src>

<mosaic_0001>
module attributes {stable_mosaic.version = 11 : i64} {
  func.func @_proj_kernel(%arg0: i32, %arg1: memref<64x16xf32, #tpu.memory_space<vmem>>, %arg2: memref<16x64xf32, #tpu.memory_space<vmem>>, %arg3: memref<1x64xf32, #tpu.memory_space<vmem>>, %arg4: memref<64x64xf32, #tpu.memory_space<vmem>>) attributes {dimension_semantics = [#tpu.dimension_semantics<parallel>], iteration_bounds = array<i64: 2>, scalar_prefetch = 0 : i64, scratch_operands = 0 : i64, tpu.core_type = #tpu.core_type<tc>, window_params = [{transform_indices = @transform_0, window_bounds = array<i64: 64, 16>}, {pipeline_mode = #tpu.pipeline_mode<synchronous>, transform_indices = @transform_1, window_bounds = array<i64: 16, 64>}, {pipeline_mode = #tpu.pipeline_mode<synchronous>, transform_indices = @transform_2, window_bounds = array<i64: 1, 64>}, {transform_indices = @transform_3, window_bounds = array<i64: 64, 64>}]} {
    %c0 = arith.constant 0 : index
    %c0_0 = arith.constant 0 : index
    %0 = vector.load %arg1[%c0, %c0_0] : memref<64x16xf32, #tpu.memory_space<vmem>>, vector<64x16xf32>
    %c0_1 = arith.constant 0 : index
    %c0_2 = arith.constant 0 : index
    %1 = vector.load %arg2[%c0_1, %c0_2] : memref<16x64xf32, #tpu.memory_space<vmem>>, vector<16x64xf32>
    %cst = arith.constant dense<0.000000e+00> : vector<64x64xf32>
    %2 = tpu.matmul %0, %1, %cst {dimension_numbers = #tpu.dot_dimension_numbers<[1], [0], [0], [1], [0, 0, 1, 1], [], []>} : vector<64x16xf32>, vector<16x64xf32>, vector<64x64xf32> -> vector<64x64xf32>
    %c0_3 = arith.constant 0 : index
    %c0_4 = arith.constant 0 : index
    %3 = vector.load %arg3[%c0_3, %c0_4] : memref<1x64xf32, #tpu.memory_space<vmem>>, vector<1x64xf32>
    %4 = vector.broadcast %3 : vector<1x64xf32> to vector<64x64xf32>
    %5 = arith.addf %2, %4 : vector<64x64xf32>
    %c0_5 = arith.constant 0 : index
    %c0_6 = arith.constant 0 : index
    %6 = vector.load %arg4[%c0_5, %c0_6] : memref<64x64xf32, #tpu.memory_space<vmem>>, vector<64x64xf32>
    tpu.vector_store %arg4[%c0_5, %c0_6], %5 {strides = array<i32>} : memref<64x64xf32, #tpu.memory_space<vmem>>, vector<64x64xf32>,
    return
  }
  func.func @transform_0(%arg0: i32) -> (i32, i32) {
    %c0_i32 = arith.constant 0 : i32
    %c0_i32_0 = arith.constant 0 : i32
    return %arg0, %c0_i32 : i32, i32
  }
  func.func @transform_1(%arg0: i32) -> (i32, i32) {
    %c0_i32 = arith.constant 0 : i32
    %c0_i32_0 = arith.constant 0 : i32
    %c0_i32_1 = arith.constant 0 : i32
    return %c0_i32, %c0_i32_0 : i32, i32
  }
  func.func @transform_2(%arg0: i32) -> (i32, i32) {
    %c0_i32 = arith.constant 0 : i32
    %c0_i32_0 = arith.constant 0 : i32
    %c0_i32_1 = arith.constant 0 : i32
    return %c0_i32, %c0_i32_0 : i32, i32
  }
  func.func @transform_3(%arg0: i32) -> (i32, i32) {
    %c0_i32 = arith.constant 0 : i32
    %c0_i32_0 = arith.constant 0 : i32
    return %arg0, %c0_i32 : i32, i32
  }
}

</mosaic_0001>

<llo_original>
// kernel: tpu_custom_call.1
$region0: #{tpu_custom_call.1}
  #allocation0 [shape = 'u32[]', space=smem, size = 0x4, offset = 0x4, fixed_abs, tag = 'smem constant byte address 0x4 - core index']
  #allocation1 [shape = 'u32[144,128]{1,0:T(1,128)}', space=vmem, size = 0x12000, scoped, tag = 'internal scratch']
  %s0 = inlined_call_operand.vmem [shape: f32[128,16], index: 0, kind: input, shape index: {}]
  %s1 = inlined_call_operand.vmem [shape: f32[16,64], index: 1, kind: input, shape index: {}]
  %s2 = inlined_call_operand.vmem [shape: f32[1,64], index: 2, kind: input, shape index: {}]
  %s3 = inlined_call_operand.vmem [shape: f32[128,64], index: 3, kind: output, shape index: {}]
  %s4 = sld [smem:[#allocation0]]
  $region45: #{tpu_custom_call.1} parent=0
    _
  %s6 = ssub.s32 1, %s4
  %s7 = scalar_select 0, %s6, %s4
  loop: start=0, step=1, limit=4
  $region2: #{tpu_custom_call.1} parent=0 // loop_pre_header
    _
  $region3: #{tpu_custom_call.1} parent=0 // loop_header
    %s9 = sphi 0, %s13
    %p10 = scmp.ge.s32.totalorder %s9, 4
    %s19 = sphi 0, %s21
    %s22 = sphi 0, %s19
    %s23 = sphi 0, %s22
    %s39 = sphi 0, %s23
    %s43 = sphi 0, %s43
    %s45 = sphi 0, %s43
    %s46 = sphi 0, %s45
    %s60 = sphi 0, %s46
    %s64 = sphi 0, %s64
    %s66 = sphi 0, %s64
    %s67 = sphi 0, %s66
    %s81 = sphi 0, %s67
    %s87 = sphi 0, %s89
    %s90 = sphi 0, %s87
    %s91 = sphi 0, %s90
    %s107 = sphi 0, %s91
  $region4: #{tpu_custom_call.1} parent=0 // loop_header_branch
    %12 = sbr.rel (%p10) target = $region8
  $region5: #{tpu_custom_call.1} parent=0 // loop_body
    %s14 = ssub.s32 %s9, 1
    %s15 = ssub.s32 %s9, 2
    %s16 = sadd.s32 %s9, 1
    %s17 = ssub.s32 %s9, %s16
    %p18 = scmp.eq.s32.totalorder %s17, 0
    %s20 = sadd.s32 %s19, 1
    %s21 = scalar_select %p18, %s19, %s20
    %p24 = pneg %p18
    %p25 = scmp.eq.s32.totalorder %s9, 1
    %p26 = por %p24, %p25
    %p27 = scmp.ne.s32.totalorder %s19, %s22
    %p28 = scmp.eq.s32.totalorder %s9, 0
    %p29 = por %p27, %p28
    %p30 = scmp.ne.s32.totalorder %s19, %s22
    %p31 = scmp.eq.s32.totalorder %s14, 1
    %p32 = por %p30, %p31
    %p33 = scmp.ne.s32.totalorder %s22, %s23
    %p34 = scmp.eq.s32.totalorder %s14, 0
    %p35 = por %p33, %p34
    %p36 = scmp.ne.s32.totalorder %s22, %s23
    %p37 = scmp.eq.s32.totalorder %s15, 1
    %p38 = por %p36, %p37
    %p40 = scmp.ne.s32.totalorder %s23, %s39
    %p41 = scmp.eq.s32.totalorder %s15, 0
    %p42 = por %p40, %p41
    %s44 = sadd.s32 %s43, 1
    %p47 = scmp.eq.s32.totalorder %s9, 1
    %p48 = scmp.ne.s32.totalorder %s43, %s45
    %p49 = scmp.eq.s32.totalorder %s9, 0
    %p50 = por %p48, %p49
    %p51 = scmp.ne.s32.totalorder %s43, %s45
    %p52 = scmp.eq.s32.totalorder %s14, 1
    %p53 = por %p51, %p52
    %p54 = scmp.ne.s32.totalorder %s45, %s46
    %p55 = scmp.eq.s32.totalorder %s14, 0
    %p56 = por %p54, %p55
    %p57 = scmp.ne.s32.totalorder %s45, %s46
    %p58 = scmp.eq.s32.totalorder %s15, 1
    %p59 = por %p57, %p58
    %p61 = scmp.ne.s32.totalorder %s46, %s60
    %p62 = scmp.eq.s32.totalorder %s15, 0
    %p63 = por %p61, %p62
    %s65 = sadd.s32 %s64, 1
    %p68 = scmp.eq.s32.totalorder %s9, 1
    %p69 = scmp.ne.s32.totalorder %s64, %s66
    %p70 = scmp.eq.s32.totalorder %s9, 0
    %p71 = por %p69, %p70
    %p72 = scmp.ne.s32.totalorder %s64, %s66
    %p73 = scmp.eq.s32.totalorder %s14, 1
    %p74 = por %p72, %p73
    %p75 = scmp.ne.s32.totalorder %s66, %s67
    %p76 = scmp.eq.s32.totalorder %s14, 0
    %p77 = por %p75, %p76
    %p78 = scmp.ne.s32.totalorder %s66, %s67
    %p79 = scmp.eq.s32.totalorder %s15, 1
    %p80 = por %p78, %p79
    %p82 = scmp.ne.s32.totalorder %s67, %s81
    %p83 = scmp.eq.s32.totalorder %s15, 0
    %p84 = por %p82, %p83
    %s85 = ssub.s32 %s9, %s16
    %p86 = scmp.eq.s32.totalorder %s85, 0
    %s88 = sadd.s32 %s87, 1
    %s89 = scalar_select %p86, %s87, %s88
    %p92 = pneg %p86
    %p93 = scmp.eq.s32.totalorder %s9, 1
    %p94 = por %p92, %p93
    %p95 = scmp.ne.s32.totalorder %s87, %s90
    %p96 = scmp.eq.s32.totalorder %s9, 0
    %p97 = por %p95, %p96
    %p98 = scmp.ne.s32.totalorder %s87, %s90
    %p99 = scmp.eq.s32.totalorder %s14, 1
    %p100 = por %p98, %p99
    %p101 = scmp.ne.s32.totalorder %s90, %s91
    %p102 = scmp.eq.s32.totalorder %s14, 0
    %p103 = por %p101, %p102
    %p104 = scmp.ne.s32.totalorder %s90, %s91
    %p105 = scmp.eq.s32.totalorder %s15, 1
    %p106 = por %p104, %p105
    %p108 = scmp.ne.s32.totalorder %s91, %s107
    %p109 = scmp.eq.s32.totalorder %s15, 0
    %p110 = por %p108, %p109
    %p111 = scmp.le.s32.totalorder 1, %s9
    %p112 = scmp.lt.s32.totalorder %s9, 3
    %p113 = pnand %p111, %p112
    %p114 = pneg %p113
    // Predicated region
    $region9: #{tpu_custom_call.1} parent=5 // pred_check
      _
    $region10: #{tpu_custom_call.1} parent=5 // pred_check_branch
      %116 = sbr.rel (%p113) target = $region12
    $region11: #{tpu_custom_call.1} parent=5 // pred_region
      %s117 = ssub.s32 %s9, 1
      // Predicated region
      $region13: #{tpu_custom_call.1} parent=11 // pred_check
        %p118 = pneg %p56
      $region14: #{tpu_custom_call.1} parent=11 // pred_check_branch
        %120 = sbr.rel (%p118) target = $region16
      $region15: #{tpu_custom_call.1} parent=11 // pred_region
        _
      $region16: #{tpu_custom_call.1} parent=11 // pred_fallthru
        _
      // Predicated region
      $region17: #{tpu_custom_call.1} parent=11 // pred_check
        %p121 = pneg %p77
      $region18: #{tpu_custom_call.1} parent=11 // pred_check_branch
        %123 = sbr.rel (%p121) target = $region20
      $region19: #{tpu_custom_call.1} parent=11 // pred_region
        _
      $region20: #{tpu_custom_call.1} parent=11 // pred_fallthru
        _
    $region12: #{tpu_custom_call.1} parent=5 // pred_fallthru
      _
    %p124 = scmp.lt.s32.totalorder %s9, 2
    // Predicated region
    $region21: #{tpu_custom_call.1} parent=5 // pred_check
      %p125 = pneg %p124
    $region22: #{tpu_custom_call.1} parent=5 // pred_check_branch
      %127 = sbr.rel (%p125) target = $region24
    $region23: #{tpu_custom_call.1} parent=5 // pred_region
      // Predicated region
      $region25: #{tpu_custom_call.1} parent=23 // pred_check
        %p128 = pneg %p29
      $region26: #{tpu_custom_call.1} parent=23 // pred_check_branch
        %130 = sbr.rel (%p128) target = $region28
      $region27: #{tpu_custom_call.1} parent=23 // pred_region
        %s131 = smul.u32 8, %s9
        %p132 = scmp.lt.s32.totalorder %s131, 15
        %s133 = scalar_select %p132, %s131, 15
        %s134 = smul.addr %s133, 8
        %s135 = scalar_lea.vmem %s0, %s134
        %s136 = smul.u32 8, %s9
      $region28: #{tpu_custom_call.1} parent=23 // pred_fallthru
        _
    $region24: #{tpu_custom_call.1} parent=5 // pred_fallthru
      _
    %p137 = scmp.le.s32.totalorder 1, %s9
    %p138 = scmp.lt.s32.totalorder %s9, 3
    %p139 = pnand %p137, %p138
    %p140 = pneg %p139
    // Predicated region
    $region29: #{tpu_custom_call.1} parent=5 // pred_check
      _
    $region30: #{tpu_custom_call.1} parent=5 // pred_check_branch
      %142 = sbr.rel (%p139) target = $region32
    $region31: #{tpu_custom_call.1} parent=5 // pred_region
      %s143 = ssub.s32 %s9, 1
      %s144 = smul.u32 8, %s14
      %p145 = scmp.lt.s32.totalorder %s144, 15
      %s146 = scalar_select %p145, %s144, 15
      %s147 = smul.addr %s146, 8
      %s148 = scalar_lea.vmem %s0, %s147
      %p149 = pneg %p35
      %p150 = pneg %p32
      %p151 = pneg %p56
      %p152 = pneg %p53
      %p153 = pneg %p77
      %p154 = pneg %p74
      %p155 = pneg %p103
      %p156 = pneg %p100
      %s157 = smul.u32 8, %s14
      %p158 = scmp.lt.s32.totalorder %s157, 15
      %s159 = scalar_select %p158, %s157, 15
      %s160 = smul.addr %s159, 8
      %s161 = scalar_lea.vmem %s3, %s160
      %s162 = smul.u32 8, %s14
      %p163 = scmp.lt.s32.totalorder %s162, 15
      %s164 = scalar_select %p163, %s162, 15
      %s165 = smul.addr %s164, 8
      %s166 = scalar_lea.vmem %s0, %s165
      %s167 = smul.u32 8, %s14
      %s168 = smul.u32 8, %s14
      %p169 = scmp.lt.s32.totalorder %s168, 15
      %s170 = scalar_select %p169, %s168, 15
      %s171 = smul.addr %s170, 8
      %s172 = scalar_lea.vmem %s3, %s171
      %s173 = smul.u32 8, %s14
      %v174 = vld [vmem:[%s166] sm:$0xff]
      %v175 = vld [vmem:[%s166 + $0x8] sm:$0xff]
      %v176 = vld [vmem:[%s166 + $0x10] sm:$0xff]
      %v177 = vld [vmem:[%s166 + $0x18] sm:$0xff]
      %v178 = vld [vmem:[%s166 + $0x20] sm:$0xff]
      %v179 = vld [vmem:[%s166 + $0x28] sm:$0xff]
      %v180 = vld [vmem:[%s166 + $0x30] sm:$0xff]
      %v181 = vld [vmem:[%s166 + $0x38] sm:$0xff]
      %v182 = vld [vmem:[%s1] sm:$0xff]
      %v183 = vld [vmem:[%s1 + $0x8] sm:$0xff]
      %v184 = vld [vmem:[%s2] sm:$0x1]
      %v186 = vlaneseq
      %v187 = vshrl.u32 %v186, 7
      %v188 = vsub.s32 0, %v187
      %v189 = vrot.slane %v184, %v188
      %vm191 = vcmask 130048
      %v193 = vsel %vm191, %v174, 0
      %v196 = vsel %vm191, %v175, 0
      %v199 = vsel %vm191, %v176, 0
      %v202 = vsel %vm191, %v177, 0
      %v205 = vsel %vm191, %v178, 0
      %v208 = vsel %vm191, %v179, 0
      %v211 = vsel %vm191, %v180, 0
      %v214 = vsel %vm191, %v181, 0
      %216 = vmatprep.subr.mxu0 0.0
      %217 = vmatpush1.msra.mxu0 %v182
      %218 = vmatprep.subr.mxu0 0.0
      %219 = vmatpush1.msra.mxu0 %v183
      %220 = vmatprep.subr.mxu0 0.0
      %221 = vmatpush1.msra.mxu0 0.0
      %222 = vmatprep.subr.mxu0 0.0
      %223 = vmatpush1.msra.mxu0 0.0
      %224 = vmatprep.subr.mxu0 0.0
      %225 = vmatpush1.msra.mxu0 0.0
      %226 = vmatprep.subr.mxu0 0.0
      %227 = vmatpush1.msra.mxu0 0.0
      %228 = vmatprep.subr.mxu0 0.0
      %229 = vmatpush1.msra.mxu0 0.0
      %230 = vmatprep.subr.mxu0 0.0
      %231 = vmatpush1.msra.mxu0 0.0
      %232 = vmatprep.subr.mxu0 0.0
      %233 = vmatpush1.msra.mxu0 0.0
      %234 = vmatprep.subr.mxu0 0.0
      %235 = vmatpush1.msra.mxu0 0.0
      %236 = vmatprep.subr.mxu0 0.0
      %237 = vmatpush1.msra.mxu0 0.0
      %238 = vmatprep.subr.mxu0 0.0
      %239 = vmatpush1.msra.mxu0 0.0
      %240 = vmatprep.subr.mxu0 0.0
      %241 = vmatpush1.msra.mxu0 0.0
      %242 = vmatprep.subr.mxu0 0.0
      %243 = vmatpush1.msra.mxu0 0.0
      %244 = vmatprep.subr.mxu0 0.0
      %245 = vmatpush1.msra.mxu0 0.0
      %246 = vmatprep.subr.mxu0 0.0
      %247 = vmatpush1.msra.mxu0 0.0
      %248 = vmatprep.subr.mxu0 0.0
      %249 = vmatpush1.msra.mxu0 0.0
      %250 = vmatprep.subr.mxu0 0.0
      %251 = vmatpush1.msra.mxu0 0.0
      %252 = vmatprep.subr.mxu0 0.0
      %253 = vmatpush1.msra.mxu0 0.0
      %254 = vmatprep.subr.mxu0 0.0
      %255 = vmatpush1.msra.mxu0 0.0
      %256 = vmatprep.subr.mxu0 0.0
      %257 = vmatpush1.msra.mxu0 0.0
      %258 = vmatprep.subr.mxu0 0.0
      %259 = vmatpush1.msra.mxu0 0.0
      %260 = vmatprep.subr.mxu0 0.0
      %261 = vmatpush1.msra.mxu0 0.0
      %262 = vmatprep.subr.mxu0 0.0
      %263 = vmatpush1.msra.mxu0 0.0
      %264 = vmatprep.subr.mxu0 0.0
      %265 = vmatpush1.msra.mxu0 0.0
      %266 = vmatprep.subr.mxu0 0.0
      %267 = vmatpush1.msra.mxu0 0.0
      %268 = vmatprep.subr.mxu0 0.0
      %269 = vmatpush1.msra.mxu0 0.0
      %270 = vmatprep.subr.mxu0 0.0
      %271 = vmatpush1.msra.mxu0 0.0
      %272 = vmatprep.subr.mxu0 0.0
      %273 = vmatpush1.msra.mxu0 0.0
      %274 = vmatprep.subr.mxu0 0.0
      %275 = vmatpush1.msra.mxu0 0.0
      %276 = vmatprep.subr.mxu0 0.0
      %277 = vmatpush1.msra.mxu0 0.0
      %278 = vmatprep.subr.mxu0 0.0
      %279 = vmatpush1.msra.mxu0 0.0
      %280 = vmatprep.mubr.f32.mxu0 0.0
      %281 = vmatmul.mubr.f32.gmra.mrb[0].mxu0 %v193
      %v282 = vpop.f32.mrb[0].mxu0
      %v283 = vadd.f32 %v189, %v282
      %v284 = vpop.f32.mrb[0].mxu0
      %285 = vmatprep.mubr.f32.mxu0 0.0
      %286 = vmatmul.mubr.f32.gmra.mrb[0].mxu0 %v196
      %v287 = vpop.f32.mrb[0].mxu0
      %v288 = vadd.f32 %v189, %v287
      %v289 = vpop.f32.mrb[0].mxu0
      %290 = vmatprep.mubr.f32.mxu0 0.0
      %291 = vmatmul.mubr.f32.gmra.mrb[0].mxu0 %v199
      %v292 = vpop.f32.mrb[0].mxu0
      %v293 = vadd.f32 %v189, %v292
      %v294 = vpop.f32.mrb[0].mxu0
      %295 = vmatprep.mubr.f32.mxu0 0.0
      %296 = vmatmul.mubr.f32.gmra.mrb[0].mxu0 %v202
      %v297 = vpop.f32.mrb[0].mxu0
      %v298 = vadd.f32 %v189, %v297
      %v299 = vpop.f32.mrb[0].mxu0
      %300 = vmatprep.mubr.f32.mxu0 0.0
      %301 = vmatmul.mubr.f32.gmra.mrb[0].mxu0 %v205
      %v302 = vpop.f32.mrb[0].mxu0
      %v303 = vadd.f32 %v189, %v302
      %v304 = vpop.f32.mrb[0].mxu0
      %305 = vmatprep.mubr.f32.mxu0 0.0
      %306 = vmatmul.mubr.f32.gmra.mrb[0].mxu0 %v208
      %v307 = vpop.f32.mrb[0].mxu0
      %v308 = vadd.f32 %v189, %v307
      %v309 = vpop.f32.mrb[0].mxu0
      %310 = vmatprep.mubr.f32.mxu0 0.0
      %311 = vmatmul.mubr.f32.gmra.mrb[0].mxu0 %v211
      %v312 = vpop.f32.mrb[0].mxu0
      %v313 = vadd.f32 %v189, %v312
      %v314 = vpop.f32.mrb[0].mxu0
      %315 = vmatprep.mubr.f32.mxu0 0.0
      %316 = vmatmul.mubr.f32.gmra.mrb[0].mxu0 %v214
      %v317 = vpop.f32.mrb[0].mxu0
      %v318 = vadd.f32 %v189, %v317
      %v319 = vpop.f32.mrb[0].mxu0
      %320 = vdwg.mxu0
      %vm321 = vcmask 523264
      %322 = vst.msk [vmem:[%s172] sm:$0xff] %vm321, %v283
      %323 = vst.msk [vmem:[%s172 + $0x8] sm:$0xff] %vm321, %v288
      %324 = vst.msk [vmem:[%s172 + $0x10] sm:$0xff] %vm321, %v293
      %325 = vst.msk [vmem:[%s172 + $0x18] sm:$0xff] %vm321, %v298
      %326 = vst.msk [vmem:[%s172 + $0x20] sm:$0xff] %vm321, %v303
      %327 = vst.msk [vmem:[%s172 + $0x28] sm:$0xff] %vm321, %v308
      %328 = vst.msk [vmem:[%s172 + $0x30] sm:$0xff] %vm321, %v313
      %329 = vst.msk [vmem:[%s172 + $0x38] sm:$0xff] %vm321, %v318
      %s330 = smul.u32 8, %s14
      %p331 = scmp.lt.s32.totalorder %s330, 15
      %s332 = scalar_select %p331, %s330, 15
      %s333 = smul.addr %s332, 8
      %s334 = scalar_lea.vmem %s3, %s333
      // Predicated region
      $region33: #{tpu_custom_call.1} parent=31 // pred_check
        %p335 = pneg %p100
      $region34: #{tpu_custom_call.1} parent=31 // pred_check_branch
        %337 = sbr.rel (%p335) target = $region36
      $region35: #{tpu_custom_call.1} parent=31 // pred_region
        %s338 = smul.u32 8, %s14
      $region36: #{tpu_custom_call.1} parent=31 // pred_fallthru
        _
    $region32: #{tpu_custom_call.1} parent=5 // pred_fallthru
      _
    %p339 = scmp.le.s32.totalorder 2, %s9
    // Predicated region
    $region37: #{tpu_custom_call.1} parent=5 // pred_check
      %p340 = pneg %p339
    $region38: #{tpu_custom_call.1} parent=5 // pred_check_branch
      %342 = sbr.rel (%p340) target = $region40
    $region39: #{tpu_custom_call.1} parent=5 // pred_region
      %s343 = ssub.s32 %s9, 2
      // Predicated region
      $region41: #{tpu_custom_call.1} parent=39 // pred_check
        %p344 = pneg %p106
      $region42: #{tpu_custom_call.1} parent=39 // pred_check_branch
        %346 = sbr.rel (%p344) target = $region44
      $region43: #{tpu_custom_call.1} parent=39 // pred_region
        %s347 = smul.u32 8, %s15
        %p348 = scmp.lt.s32.totalorder %s347, 15
        %s349 = scalar_select %p348, %s347, 15
        %s350 = smul.addr %s349, 8
        %s351 = scalar_lea.vmem %s3, %s350
      $region44: #{tpu_custom_call.1} parent=39 // pred_fallthru
        _
    $region40: #{tpu_custom_call.1} parent=5 // pred_fallthru
      _
  $region6: #{tpu_custom_call.1} parent=0 // loop_footer
    %s13 = sadd.s32 1, %s9
  $region7: #{tpu_custom_call.1} parent=0 // loop_footer_branch
    %8 = sbr.rel target = $region3
  $region8: #{tpu_custom_call.1} parent=0 // loop_exit
    _

</llo_original>
